<compile_context>
chip_gen: v7x
topology: tpu7x:2x2x1
jax: 0.10.0
libtpu: 0.0.40
codegen_flags: <defaults>
</compile_context>

<pallas_src>
import functools

import jax
import jax.numpy as jnp
from jax.experimental import pallas as pl
from jax.experimental.pallas import tpu as pltpu


_TM_MAX = 65536                    # max flat spatial elements per grid step
_VMEM_BUDGET = 12 * 1024 * 1024    # double-buffered working-set budget (bytes)
_VMEM_LIMIT = 32 * 1024 * 1024     # scoped VMEM limit, safe on v5e/v6e/v7x


# ----------------------------------------------------------------------------
# Tiling plan
# ----------------------------------------------------------------------------
def _fold_plan(hw, tm_max):
    """Fold the spatial axis by f (sublane-dense) and tile the folded axis.

    Returns (f, L, tl, nk, needs_mask):
      f  : fold factor (largest of 8,4,2,1 dividing hw) -> rows = B*f sublanes
      L  : folded spatial length (hw // f)
      tl : lane tile along the folded axis (multiple of 128, or full extent)
      nk : number of grid steps = cdiv(L, tl)
      needs_mask : True iff the last tile is partial (loss sums need masking)
    """
    f = 8
    while f > 1 and hw % f != 0:
        f //= 2
    L = hw // f
    tl_max = max(128, ((tm_max // f) // 128) * 128)
    tl = L if L <= tl_max else tl_max
    nk = pl.cdiv(L, tl)
    needs_mask = (L % tl) != 0
    return f, L, tl, nk, needs_mask


def _tm_from_budget(rows_per_elem):
    """Flat-spatial tile cap from the double-buffered f32 VMEM budget."""
    per_elem_bytes = 2 * 4 * rows_per_elem        # 2 buffers x 4 bytes x rows
    return max(1024, min(_TM_MAX, _VMEM_BUDGET // per_elem_bytes))


# ----------------------------------------------------------------------------
# Kernel bodies
# ----------------------------------------------------------------------------
def _heads_body(x_ref, w_ref, b_ref, pp_ref, pc_ref, ps_ref, pw_ref):
    """Four 1x1-conv heads as dense VPU FMAs on (B, f, tl) tiles.

    x_ref: (B, C, f, tl) VMEM; w_ref: (C, 4) SMEM; b_ref: (1, 4) SMEM.
    Outputs: 4 x (B, f, tl) VMEM (sublane- and lane-dense).
    """
    C = x_ref.shape[1]
    xs = [x_ref[:, c, :, :] for c in range(C)]   # hoisted: 4 loads per tile
    out_refs = (pp_ref, pc_ref, ps_ref, pw_ref)
    for h in range(4):
        pred = xs[0] * w_ref[0, h]
        for c in range(1, C):
            pred = pred + xs[c] * w_ref[c, h]
        out_refs[h][...] = pred + b_ref[0, h]


def _fused_body(L, tl, needs_mask,
                x_ref, tp_ref, tc_ref, ts_ref, tw_ref, w_ref, b_ref,
                loss_ref, pp_ref, pc_ref, ps_ref, pw_ref):
    """Fused 1x1-conv heads + per-head smooth-L1 (beta=1.0) per-tile sums.

    Grid: (nk,) fully "parallel" over folded-spatial chunks.
    loss_ref: (1, 4, 1) block of the (nk, 4, 1) per-tile partial-sum output.
    """
    k = pl.program_id(0)
    C = x_ref.shape[1]

    xs = [x_ref[:, c, :, :] for c in range(C)]   # (B, f, tl) each, loaded once

    if needs_mask:
        col = k * tl + jax.lax.broadcasted_iota(jnp.int32, (1, 1, tl), 2)
        valid = col < L

    t_refs = (tp_ref, tc_ref, ts_ref, tw_ref)
    p_refs = (pp_ref, pc_ref, ps_ref, pw_ref)

    rows = []
    for h in range(4):
        # Head h: pred = sum_c w[c, h] * x[:, c] + b[h]   (pure VPU, dense tiles)
        pred = xs[0] * w_ref[0, h]
        for c in range(1, C):
            pred = pred + xs[c] * w_ref[c, h]
        pred = pred + b_ref[0, h]
        p_refs[h][...] = pred                     # single HBM write per element

        # Smooth-L1 (beta = 1.0), elementwise; mask only the partial tail tile.
        d = pred - t_refs[h][...]
        ad = jnp.abs(d)
        pe = jnp.where(ad < 1.0, 0.5 * d * d, ad - 0.5)
        if needs_mask:
            pe = jnp.where(valid, pe, 0.0)

        # Lane-first reduction (dense VPU adds), tiny cross-sublane tail.
        r = jnp.sum(pe, axis=2, keepdims=True)            # (B, f, 1)
        r = jnp.sum(r, axis=0)                            # (f, 1)
        rows.append(jnp.sum(r, axis=0, keepdims=True))    # (1, 1)

    loss_ref[...] = jnp.concatenate(rows, axis=0).reshape(1, 4, 1)


def _smooth_l1_body(L, tl, needs_mask,
                    pp_ref, pc_ref, ps_ref, pw_ref,
                    tp_ref, tc_ref, ts_ref, tw_ref,
                    out_ref):
    """Tiled smooth-L1 per-tile sums over 4 pred/target pairs (generic path)."""
    k = pl.program_id(0)

    if needs_mask:
        col = k * tl + jax.lax.broadcasted_iota(jnp.int32, (1, 1, tl), 2)
        valid = col < L

    p_refs = (pp_ref, pc_ref, ps_ref, pw_ref)
    t_refs = (tp_ref, tc_ref, ts_ref, tw_ref)
    rows = []
    for h in range(4):
        d = p_refs[h][...] - t_refs[h][...]
        ad = jnp.abs(d)
        pe = jnp.where(ad < 1.0, 0.5 * d * d, ad - 0.5)
        if needs_mask:
            pe = jnp.where(valid, pe, 0.0)
        r = jnp.sum(pe, axis=2, keepdims=True)
        r = jnp.sum(r, axis=0)
        rows.append(jnp.sum(r, axis=0, keepdims=True))
    out_ref[...] = jnp.concatenate(rows, axis=0).reshape(1, 4, 1)


# ----------------------------------------------------------------------------
# Wrappers
# ----------------------------------------------------------------------------
def conv1x1_heads(x_nchw, w, b):
    """Four 1x1-conv heads.  x: [B, C, H, W] -> 4 x [B, 1, H, W] (f32)."""
    B, C, H, W = x_nchw.shape
    hw = H * W
    tm_max = _tm_from_budget(B * (C + 4))
    f, L, tl, nk, _ = _fold_plan(hw, tm_max)

    x4 = x_nchw.astype(jnp.float32).reshape(B, C, f, L)       # free reshape
    w = w.astype(jnp.float32)
    b = b.astype(jnp.float32).reshape(1, 4)

    pred_spec = pl.BlockSpec((B, f, tl), lambda k: (0, 0, k))
    smem_spec = pl.BlockSpec(memory_space=pltpu.MemorySpace.SMEM)
    pred_shape = jax.ShapeDtypeStruct((B, f, L), jnp.float32)

    preds = pl.pallas_call(
        _heads_body,
        out_shape=(pred_shape,) * 4,
        grid=(nk,),
        in_specs=[
            pl.BlockSpec((B, C, f, tl), lambda k: (0, 0, 0, k)),
            smem_spec,   # w
            smem_spec,   # b
        ],
        out_specs=[pred_spec] * 4,
        compiler_params=pltpu.CompilerParams(
            dimension_semantics=("parallel",),
            vmem_limit_bytes=_VMEM_LIMIT,
        ),
    )(x4, w, b)

    return tuple(p.reshape(B, 1, H, W) for p in preds)        # free reshapes


def fused_heads_smooth_l1(x_nchw, targets, w, b):
    """Fused heads + smooth-L1 in ONE pallas_call.

    Returns (sums, preds): sums is (4,) per-head smooth-L1 *sums* (divide by the
    element count outside), preds are 4 x [B, 1, H, W] head outputs.
    """
    B, C, H, W = x_nchw.shape
    hw = H * W
    tm_max = _tm_from_budget(B * (C + 8))
    f, L, tl, nk, needs_mask = _fold_plan(hw, tm_max)

    x4 = x_nchw.astype(jnp.float32).reshape(B, C, f, L)        # free reshape
    tgts = [t.astype(jnp.float32).reshape(B, f, L) for t in targets]
    w = w.astype(jnp.float32)
    b = b.astype(jnp.float32).reshape(1, 4)

    kernel = functools.partial(_fused_body, L, tl, needs_mask)

    data_spec = pl.BlockSpec((B, f, tl), lambda k: (0, 0, k))
    smem_spec = pl.BlockSpec(memory_space=pltpu.MemorySpace.SMEM)
    pred_shape = jax.ShapeDtypeStruct((B, f, L), jnp.float32)

    outs = pl.pallas_call(
        kernel,
        out_shape=(
            jax.ShapeDtypeStruct((nk, 4, 1), jnp.float32),     # loss partials
            pred_shape, pred_shape, pred_shape, pred_shape,    # 4 preds
        ),
        grid=(nk,),
        in_specs=[
            pl.BlockSpec((B, C, f, tl), lambda k: (0, 0, 0, k)),
            data_spec, data_spec, data_spec, data_spec,        # targets
            smem_spec,                                         # w
            smem_spec,                                         # b
        ],
        out_specs=[
            pl.BlockSpec((1, 4, 1), lambda k: (k, 0, 0)),
            data_spec, data_spec, data_spec, data_spec,
        ],
        compiler_params=pltpu.CompilerParams(
            dimension_semantics=("parallel",),
            vmem_limit_bytes=_VMEM_LIMIT,
        ),
    )(x4, *tgts, w, b)

    sums = jnp.sum(outs[0][:, :, 0], axis=0)                   # (4,)
    preds = tuple(p.reshape(B, 1, H, W) for p in outs[1:])     # free reshapes
    return sums, preds


def smooth_l1_sums(preds, targets):
    """Tiled Pallas smooth-L1 sums for 4 pred/target pairs of equal shape.

    Returns (4,) per-pair sums (mean = sum / numel, done by the caller).
    """
    B = preds[0].shape[0]
    hw = 1
    for d in preds[0].shape[1:]:
        hw *= int(d)
    tm_max = _tm_from_budget(8 * B)
    f, L, tl, nk, needs_mask = _fold_plan(hw, tm_max)

    def fold(a):
        return a.astype(jnp.float32).reshape(B, f, L)          # free reshape

    args = [fold(p) for p in preds] + [fold(t) for t in targets]
    data_spec = pl.BlockSpec((B, f, tl), lambda k: (0, 0, k))
    kernel = functools.partial(_smooth_l1_body, L, tl, needs_mask)

    partials = pl.pallas_call(
        kernel,
        out_shape=jax.ShapeDtypeStruct((nk, 4, 1), jnp.float32),
        grid=(nk,),
        in_specs=[data_spec] * 8,
        out_specs=pl.BlockSpec((1, 4, 1), lambda k: (k, 0, 0)),
        compiler_params=pltpu.CompilerParams(
            dimension_semantics=("parallel",),
            vmem_limit_bytes=_VMEM_LIMIT,
        ),
    )(*args)
    return jnp.sum(partials[:, :, 0], axis=0)


# ----------------------------------------------------------------------------
# Model classes mirroring the PyTorch module
# ----------------------------------------------------------------------------
class GraspModel:
    """An abstract model for grasp network in a common format (JAX/Pallas)."""

    def forward(self, x_in):
        # Abstract in the PyTorch reference; subclasses supply it.
        raise NotImplementedError()

    def __call__(self, x_in):
        return self.forward(x_in)

    def compute_loss(self, xc, yc):
        # Generic path: subclass forward + one tiled Pallas smooth-L1 kernel.
        y_pos, y_cos, y_sin, y_width = yc
        pos_pred, cos_pred, sin_pred, width_pred = self(xc)

        n_elem = 1
        for d in pos_pred.shape:
            n_elem *= int(d)

        sums = smooth_l1_sums(
            (pos_pred, cos_pred, sin_pred, width_pred),
            (y_pos, y_cos, y_sin, y_width),
        )
        losses = sums / n_elem   # mean reduction, matching F.smooth_l1_loss
        p_loss, cos_loss, sin_loss, width_loss = (
            losses[0], losses[1], losses[2], losses[3])
        return {
            "loss": p_loss + cos_loss + sin_loss + width_loss,
            "losses": {"p_loss": p_loss, "cos_loss": cos_loss,
                       "sin_loss": sin_loss, "width_loss": width_loss},
            "pred": {"pos": pos_pred, "cos": cos_pred,
                     "sin": sin_pred, "width": width_pred},
        }

    def predict(self, xc):
        pos_pred, cos_pred, sin_pred, width_pred = self(xc)
        return {"pos": pos_pred, "cos": cos_pred,
                "sin": sin_pred, "width": width_pred}


class SimpleGraspHeads(GraspModel):
    """Minimal concrete GraspModel: four 1x1-conv heads over the input channels."""

    def __init__(self, in_channels=4):
        kw, kb = jax.random.split(jax.random.PRNGKey(42))
        self.w = jax.random.normal(kw, (in_channels, 4), dtype=jnp.float32) * 0.1
        self.b = jax.random.normal(kb, (1, 4), dtype=jnp.float32) * 0.01

    def forward(self, x_in):
        return conv1x1_heads(x_in, self.w, self.b)

    def compute_loss(self, xc, yc):
        # Fused fast path: heads + smooth-L1 in a single pallas_call (numerically
        # identical to the generic path; the predictions are written once and
        # never re-read for the loss).
        y_pos, y_cos, y_sin, y_width = yc
        sums, (pos_pred, cos_pred, sin_pred, width_pred) = fused_heads_smooth_l1(
            xc, (y_pos, y_cos, y_sin, y_width), self.w, self.b)

        B, _, H, W = xc.shape
        n_elem = B * H * W
        losses = sums / n_elem
        p_loss, cos_loss, sin_loss, width_loss = (
            losses[0], losses[1], losses[2], losses[3])
        return {
            "loss": p_loss + cos_loss + sin_loss + width_loss,
            "losses": {"p_loss": p_loss, "cos_loss": cos_loss,
                       "sin_loss": sin_loss, "width_loss": width_loss},
            "pred": {"pos": pos_pred, "cos": cos_pred,
                     "sin": sin_pred, "width": width_pred},
        }


# ----------------------------------------------------------------------------
# Main
# ----------------------------------------------------------------------------
if __name__ == "__main__":
    B, C, H, W = 2, 4, 16, 16

    key = jax.random.PRNGKey(0)
    kx, kp, kc, ks, kw = jax.random.split(key, 5)
    x = jax.random.normal(kx, (B, C, H, W), dtype=jnp.float32)
    y_pos = jax.random.normal(kp, (B, 1, H, W), dtype=jnp.float32)
    y_cos = jax.random.normal(kc, (B, 1, H, W), dtype=jnp.float32)
    y_sin = jax.random.normal(ks, (B, 1, H, W), dtype=jnp.float32)
    y_width = jax.random.normal(kw, (B, 1, H, W), dtype=jnp.float32)
    yc = (y_pos, y_cos, y_sin, y_width)

    model = SimpleGraspHeads(in_channels=C)

    out = model.compute_loss(x, yc)                        # fused Pallas path
    pred = model.predict(x)                                # heads-only Pallas path
    out_generic = GraspModel.compute_loss(model, x, yc)    # generic path (2 kernels)

    jax.block_until_ready(out["loss"])
    jax.block_until_ready(pred["pos"])
    jax.block_until_ready(out_generic["loss"])

    # Pure-JAX reference cross-check.
    ref_out = jnp.einsum("bchw,cn->bnhw", x, model.w) + model.b.reshape(1, 4, 1, 1)
    ref_preds = [ref_out[:, i:i + 1] for i in range(4)]

    def ref_smooth_l1(p, t):
        d = p - t
        ad = jnp.abs(d)
        return jnp.mean(jnp.where(ad < 1.0, 0.5 * d * d, ad - 0.5))

    ref_total = sum(ref_smooth_l1(p, t) for p, t in zip(ref_preds, yc))

    assert jnp.allclose(out["loss"], ref_total, rtol=1e-5, atol=1e-5)
    assert jnp.allclose(out_generic["loss"], ref_total, rtol=1e-5, atol=1e-5)
    for name, rp in zip(("pos", "cos", "sin", "width"), ref_preds):
        assert jnp.allclose(pred[name], rp, rtol=1e-5, atol=1e-5)
        assert jnp.allclose(out["pred"][name], rp, rtol=1e-5, atol=1e-5)

    print("KERNEL_OK")
</pallas_src>

<mosaic_0001>
module attributes {stable_mosaic.version = 11 : i64} {
  func.func @_fused_body(%arg0: i32, %arg1: memref<2x4x8x32xf32, #tpu.memory_space<vmem>>, %arg2: memref<2x8x32xf32, #tpu.memory_space<vmem>>, %arg3: memref<2x8x32xf32, #tpu.memory_space<vmem>>, %arg4: memref<2x8x32xf32, #tpu.memory_space<vmem>>, %arg5: memref<2x8x32xf32, #tpu.memory_space<vmem>>, %arg6: memref<4x4xf32, #tpu.memory_space<smem>>, %arg7: memref<1x4xf32, #tpu.memory_space<smem>>, %arg8: memref<1x4x1xf32, #tpu.memory_space<vmem>>, %arg9: memref<2x8x32xf32, #tpu.memory_space<vmem>>, %arg10: memref<2x8x32xf32, #tpu.memory_space<vmem>>, %arg11: memref<2x8x32xf32, #tpu.memory_space<vmem>>, %arg12: memref<2x8x32xf32, #tpu.memory_space<vmem>>) attributes {dimension_semantics = [#tpu.dimension_semantics<parallel>], iteration_bounds = array<i64: 1>, scalar_prefetch = 0 : i64, scratch_operands = 0 : i64, tpu.core_type = #tpu.core_type<tc>, window_params = [{transform_indices = @transform_0, window_bounds = array<i64: 2, 4, 8, 32>}, {transform_indices = @transform_1, window_bounds = array<i64: 2, 8, 32>}, {transform_indices = @transform_2, window_bounds = array<i64: 2, 8, 32>}, {transform_indices = @transform_3, window_bounds = array<i64: 2, 8, 32>}, {transform_indices = @transform_4, window_bounds = array<i64: 2, 8, 32>}, {transform_indices = @transform_5, window_bounds = array<i64: 4, 4>}, {transform_indices = @transform_6, window_bounds = array<i64: 1, 4>}, {transform_indices = @transform_7, window_bounds = array<i64: 1, 4, 1>}, {transform_indices = @transform_8, window_bounds = array<i64: 2, 8, 32>}, {transform_indices = @transform_9, window_bounds = array<i64: 2, 8, 32>}, {transform_indices = @transform_10, window_bounds = array<i64: 2, 8, 32>}, {transform_indices = @transform_11, window_bounds = array<i64: 2, 8, 32>}]} {
    %c0 = arith.constant 0 : index
    %c0_0 = arith.constant 0 : index
    %c0_1 = arith.constant 0 : index
    %c0_2 = arith.constant 0 : index
    %0 = vector.load %arg1[%c0, %c0_0, %c0_1, %c0_2] : memref<2x4x8x32xf32, #tpu.memory_space<vmem>>, vector<2x1x8x32xf32>
    %1 = vector.shape_cast %0 : vector<2x1x8x32xf32> to vector<2x8x32xf32>
    %c0_3 = arith.constant 0 : index
    %c1 = arith.constant 1 : index
    %c0_4 = arith.constant 0 : index
    %c0_5 = arith.constant 0 : index
    %2 = vector.load %arg1[%c0_3, %c1, %c0_4, %c0_5] : memref<2x4x8x32xf32, #tpu.memory_space<vmem>>, vector<2x1x8x32xf32>
    %3 = vector.shape_cast %2 : vector<2x1x8x32xf32> to vector<2x8x32xf32>
    %c0_6 = arith.constant 0 : index
    %c2 = arith.constant 2 : index
    %c0_7 = arith.constant 0 : index
    %c0_8 = arith.constant 0 : index
    %4 = vector.load %arg1[%c0_6, %c2, %c0_7, %c0_8] : memref<2x4x8x32xf32, #tpu.memory_space<vmem>>, vector<2x1x8x32xf32>
    %5 = vector.shape_cast %4 : vector<2x1x8x32xf32> to vector<2x8x32xf32>
    %c0_9 = arith.constant 0 : index
    %c3 = arith.constant 3 : index
    %c0_10 = arith.constant 0 : index
    %c0_11 = arith.constant 0 : index
    %6 = vector.load %arg1[%c0_9, %c3, %c0_10, %c0_11] : memref<2x4x8x32xf32, #tpu.memory_space<vmem>>, vector<2x1x8x32xf32>
    %7 = vector.shape_cast %6 : vector<2x1x8x32xf32> to vector<2x8x32xf32>
    %c0_12 = arith.constant 0 : index
    %c0_13 = arith.constant 0 : index
    %8 = memref.load %arg6[%c0_12, %c0_13] : memref<4x4xf32, #tpu.memory_space<smem>>
    %9 = vector.broadcast %8 : f32 to vector<2x8x32xf32>
    %10 = arith.mulf %1, %9 : vector<2x8x32xf32>
    %c1_14 = arith.constant 1 : index
    %c0_15 = arith.constant 0 : index
    %11 = memref.load %arg6[%c1_14, %c0_15] : memref<4x4xf32, #tpu.memory_space<smem>>
    %12 = vector.broadcast %11 : f32 to vector<2x8x32xf32>
    %13 = arith.mulf %3, %12 : vector<2x8x32xf32>
    %14 = arith.addf %10, %13 : vector<2x8x32xf32>
    %c2_16 = arith.constant 2 : index
    %c0_17 = arith.constant 0 : index
    %15 = memref.load %arg6[%c2_16, %c0_17] : memref<4x4xf32, #tpu.memory_space<smem>>
    %16 = vector.broadcast %15 : f32 to vector<2x8x32xf32>
    %17 = arith.mulf %5, %16 : vector<2x8x32xf32>
    %18 = arith.addf %14, %17 : vector<2x8x32xf32>
    %c3_18 = arith.constant 3 : index
    %c0_19 = arith.constant 0 : index
    %19 = memref.load %arg6[%c3_18, %c0_19] : memref<4x4xf32, #tpu.memory_space<smem>>
    %20 = vector.broadcast %19 : f32 to vector<2x8x32xf32>
    %21 = arith.mulf %7, %20 : vector<2x8x32xf32>
    %22 = arith.addf %18, %21 : vector<2x8x32xf32>
    %c0_20 = arith.constant 0 : index
    %c0_21 = arith.constant 0 : index
    %23 = memref.load %arg7[%c0_20, %c0_21] : memref<1x4xf32, #tpu.memory_space<smem>>
    %24 = vector.broadcast %23 : f32 to vector<2x8x32xf32>
    %25 = arith.addf %22, %24 : vector<2x8x32xf32>
    %c0_22 = arith.constant 0 : index
    %c0_23 = arith.constant 0 : index
    %c0_24 = arith.constant 0 : index
    %26 = vector.load %arg9[%c0_22, %c0_23, %c0_24] : memref<2x8x32xf32, #tpu.memory_space<vmem>>, vector<2x8x32xf32>
    tpu.vector_store %arg9[%c0_22, %c0_23, %c0_24], %25 {strides = array<i32>} : memref<2x8x32xf32, #tpu.memory_space<vmem>>, vector<2x8x32xf32>,
    %c0_25 = arith.constant 0 : index
    %c0_26 = arith.constant 0 : index
    %c0_27 = arith.constant 0 : index
    %27 = vector.load %arg2[%c0_25, %c0_26, %c0_27] : memref<2x8x32xf32, #tpu.memory_space<vmem>>, vector<2x8x32xf32>
    %28 = arith.subf %25, %27 : vector<2x8x32xf32>
    %29 = math.absf %28 : vector<2x8x32xf32>
    %cst = arith.constant 1.000000e+00 : f32
    %30 = vector.broadcast %cst : f32 to vector<2x8x32xf32>
    %31 = arith.cmpf olt, %29, %30 : vector<2x8x32xf32>
    %cst_28 = arith.constant 5.000000e-01 : f32
    %32 = vector.broadcast %cst_28 : f32 to vector<2x8x32xf32>
    %33 = arith.mulf %32, %28 : vector<2x8x32xf32>
    %34 = arith.mulf %33, %28 : vector<2x8x32xf32>
    %cst_29 = arith.constant 5.000000e-01 : f32
    %35 = vector.broadcast %cst_29 : f32 to vector<2x8x32xf32>
    %36 = arith.subf %29, %35 : vector<2x8x32xf32>
    %37 = arith.select %31, %34, %36 : vector<2x8x32xi1>, vector<2x8x32xf32>
    %cst_30 = arith.constant dense<0.000000e+00> : vector<2x8xf32>
    %38 = vector.multi_reduction <add>, %37, %cst_30 [2] : vector<2x8x32xf32> to vector<2x8xf32>
    %39 = vector.shape_cast %38 : vector<2x8xf32> to vector<2x8x1xf32>
    %cst_31 = arith.constant dense<0.000000e+00> : vector<8x1xf32>
    %40 = vector.multi_reduction <add>, %39, %cst_31 [0] : vector<2x8x1xf32> to vector<8x1xf32>
    %cst_32 = arith.constant dense<0.000000e+00> : vector<1xf32>
    %41 = vector.multi_reduction <add>, %40, %cst_32 [0] : vector<8x1xf32> to vector<1xf32>
    %42 = vector.shape_cast %41 : vector<1xf32> to vector<1x1xf32>
    %c0_33 = arith.constant 0 : index
    %c1_34 = arith.constant 1 : index
    %43 = memref.load %arg6[%c0_33, %c1_34] : memref<4x4xf32, #tpu.memory_space<smem>>
    %44 = vector.broadcast %43 : f32 to vector<2x8x32xf32>
    %45 = arith.mulf %1, %44 : vector<2x8x32xf32>
    %c1_35 = arith.constant 1 : index
    %c1_36 = arith.constant 1 : index
    %46 = memref.load %arg6[%c1_35, %c1_36] : memref<4x4xf32, #tpu.memory_space<smem>>
    %47 = vector.broadcast %46 : f32 to vector<2x8x32xf32>
    %48 = arith.mulf %3, %47 : vector<2x8x32xf32>
    %49 = arith.addf %45, %48 : vector<2x8x32xf32>
    %c2_37 = arith.constant 2 : index
    %c1_38 = arith.constant 1 : index
    %50 = memref.load %arg6[%c2_37, %c1_38] : memref<4x4xf32, #tpu.memory_space<smem>>
    %51 = vector.broadcast %50 : f32 to vector<2x8x32xf32>
    %52 = arith.mulf %5, %51 : vector<2x8x32xf32>
    %53 = arith.addf %49, %52 : vector<2x8x32xf32>
    %c3_39 = arith.constant 3 : index
    %c1_40 = arith.constant 1 : index
    %54 = memref.load %arg6[%c3_39, %c1_40] : memref<4x4xf32, #tpu.memory_space<smem>>
    %55 = vector.broadcast %54 : f32 to vector<2x8x32xf32>
    %56 = arith.mulf %7, %55 : vector<2x8x32xf32>
    %57 = arith.addf %53, %56 : vector<2x8x32xf32>
    %c0_41 = arith.constant 0 : index
    %c1_42 = arith.constant 1 : index
    %58 = memref.load %arg7[%c0_41, %c1_42] : memref<1x4xf32, #tpu.memory_space<smem>>
    %59 = vector.broadcast %58 : f32 to vector<2x8x32xf32>
    %60 = arith.addf %57, %59 : vector<2x8x32xf32>
    %c0_43 = arith.constant 0 : index
    %c0_44 = arith.constant 0 : index
    %c0_45 = arith.constant 0 : index
    %61 = vector.load %arg10[%c0_43, %c0_44, %c0_45] : memref<2x8x32xf32, #tpu.memory_space<vmem>>, vector<2x8x32xf32>
    tpu.vector_store %arg10[%c0_43, %c0_44, %c0_45], %60 {strides = array<i32>} : memref<2x8x32xf32, #tpu.memory_space<vmem>>, vector<2x8x32xf32>,
    %c0_46 = arith.constant 0 : index
    %c0_47 = arith.constant 0 : index
    %c0_48 = arith.constant 0 : index
    %62 = vector.load %arg3[%c0_46, %c0_47, %c0_48] : memref<2x8x32xf32, #tpu.memory_space<vmem>>, vector<2x8x32xf32>
    %63 = arith.subf %60, %62 : vector<2x8x32xf32>
    %64 = math.absf %63 : vector<2x8x32xf32>
    %cst_49 = arith.constant 1.000000e+00 : f32
    %65 = vector.broadcast %cst_49 : f32 to vector<2x8x32xf32>
    %66 = arith.cmpf olt, %64, %65 : vector<2x8x32xf32>
    %cst_50 = arith.constant 5.000000e-01 : f32
    %67 = vector.broadcast %cst_50 : f32 to vector<2x8x32xf32>
    %68 = arith.mulf %67, %63 : vector<2x8x32xf32>
    %69 = arith.mulf %68, %63 : vector<2x8x32xf32>
    %cst_51 = arith.constant 5.000000e-01 : f32
    %70 = vector.broadcast %cst_51 : f32 to vector<2x8x32xf32>
    %71 = arith.subf %64, %70 : vector<2x8x32xf32>
    %72 = arith.select %66, %69, %71 : vector<2x8x32xi1>, vector<2x8x32xf32>
    %cst_52 = arith.constant dense<0.000000e+00> : vector<2x8xf32>
    %73 = vector.multi_reduction <add>, %72, %cst_52 [2] : vector<2x8x32xf32> to vector<2x8xf32>
    %74 = vector.shape_cast %73 : vector<2x8xf32> to vector<2x8x1xf32>
    %cst_53 = arith.constant dense<0.000000e+00> : vector<8x1xf32>
    %75 = vector.multi_reduction <add>, %74, %cst_53 [0] : vector<2x8x1xf32> to vector<8x1xf32>
    %cst_54 = arith.constant dense<0.000000e+00> : vector<1xf32>
    %76 = vector.multi_reduction <add>, %75, %cst_54 [0] : vector<8x1xf32> to vector<1xf32>
    %77 = vector.shape_cast %76 : vector<1xf32> to vector<1x1xf32>
    %c0_55 = arith.constant 0 : index
    %c2_56 = arith.constant 2 : index
    %78 = memref.load %arg6[%c0_55, %c2_56] : memref<4x4xf32, #tpu.memory_space<smem>>
    %79 = vector.broadcast %78 : f32 to vector<2x8x32xf32>
    %80 = arith.mulf %1, %79 : vector<2x8x32xf32>
    %c1_57 = arith.constant 1 : index
    %c2_58 = arith.constant 2 : index
    %81 = memref.load %arg6[%c1_57, %c2_58] : memref<4x4xf32, #tpu.memory_space<smem>>
    %82 = vector.broadcast %81 : f32 to vector<2x8x32xf32>
    %83 = arith.mulf %3, %82 : vector<2x8x32xf32>
    %84 = arith.addf %80, %83 : vector<2x8x32xf32>
    %c2_59 = arith.constant 2 : index
    %c2_60 = arith.constant 2 : index
    %85 = memref.load %arg6[%c2_59, %c2_60] : memref<4x4xf32, #tpu.memory_space<smem>>
    %86 = vector.broadcast %85 : f32 to vector<2x8x32xf32>
    %87 = arith.mulf %5, %86 : vector<2x8x32xf32>
    %88 = arith.addf %84, %87 : vector<2x8x32xf32>
    %c3_61 = arith.constant 3 : index
    %c2_62 = arith.constant 2 : index
    %89 = memref.load %arg6[%c3_61, %c2_62] : memref<4x4xf32, #tpu.memory_space<smem>>
    %90 = vector.broadcast %89 : f32 to vector<2x8x32xf32>
    %91 = arith.mulf %7, %90 : vector<2x8x32xf32>
    %92 = arith.addf %88, %91 : vector<2x8x32xf32>
    %c0_63 = arith.constant 0 : index
    %c2_64 = arith.constant 2 : index
    %93 = memref.load %arg7[%c0_63, %c2_64] : memref<1x4xf32, #tpu.memory_space<smem>>
    %94 = vector.broadcast %93 : f32 to vector<2x8x32xf32>
    %95 = arith.addf %92, %94 : vector<2x8x32xf32>
    %c0_65 = arith.constant 0 : index
    %c0_66 = arith.constant 0 : index
    %c0_67 = arith.constant 0 : index
    %96 = vector.load %arg11[%c0_65, %c0_66, %c0_67] : memref<2x8x32xf32, #tpu.memory_space<vmem>>, vector<2x8x32xf32>
    tpu.vector_store %arg11[%c0_65, %c0_66, %c0_67], %95 {strides = array<i32>} : memref<2x8x32xf32, #tpu.memory_space<vmem>>, vector<2x8x32xf32>,
    %c0_68 = arith.constant 0 : index
    %c0_69 = arith.constant 0 : index
    %c0_70 = arith.constant 0 : index
    %97 = vector.load %arg4[%c0_68, %c0_69, %c0_70] : memref<2x8x32xf32, #tpu.memory_space<vmem>>, vector<2x8x32xf32>
    %98 = arith.subf %95, %97 : vector<2x8x32xf32>
    %99 = math.absf %98 : vector<2x8x32xf32>
    %cst_71 = arith.constant 1.000000e+00 : f32
    %100 = vector.broadcast %cst_71 : f32 to vector<2x8x32xf32>
    %101 = arith.cmpf olt, %99, %100 : vector<2x8x32xf32>
    %cst_72 = arith.constant 5.000000e-01 : f32
    %102 = vector.broadcast %cst_72 : f32 to vector<2x8x32xf32>
    %103 = arith.mulf %102, %98 : vector<2x8x32xf32>
    %104 = arith.mulf %103, %98 : vector<2x8x32xf32>
    %cst_73 = arith.constant 5.000000e-01 : f32
    %105 = vector.broadcast %cst_73 : f32 to vector<2x8x32xf32>
    %106 = arith.subf %99, %105 : vector<2x8x32xf32>
    %107 = arith.select %101, %104, %106 : vector<2x8x32xi1>, vector<2x8x32xf32>
    %cst_74 = arith.constant dense<0.000000e+00> : vector<2x8xf32>
    %108 = vector.multi_reduction <add>, %107, %cst_74 [2] : vector<2x8x32xf32> to vector<2x8xf32>
    %109 = vector.shape_cast %108 : vector<2x8xf32> to vector<2x8x1xf32>
    %cst_75 = arith.constant dense<0.000000e+00> : vector<8x1xf32>
    %110 = vector.multi_reduction <add>, %109, %cst_75 [0] : vector<2x8x1xf32> to vector<8x1xf32>
    %cst_76 = arith.constant dense<0.000000e+00> : vector<1xf32>
    %111 = vector.multi_reduction <add>, %110, %cst_76 [0] : vector<8x1xf32> to vector<1xf32>
    %112 = vector.shape_cast %111 : vector<1xf32> to vector<1x1xf32>
    %c0_77 = arith.constant 0 : index
    %c3_78 = arith.constant 3 : index
    %113 = memref.load %arg6[%c0_77, %c3_78] : memref<4x4xf32, #tpu.memory_space<smem>>
    %114 = vector.broadcast %113 : f32 to vector<2x8x32xf32>
    %115 = arith.mulf %1, %114 : vector<2x8x32xf32>
    %c1_79 = arith.constant 1 : index
    %c3_80 = arith.constant 3 : index
    %116 = memref.load %arg6[%c1_79, %c3_80] : memref<4x4xf32, #tpu.memory_space<smem>>
    %117 = vector.broadcast %116 : f32 to vector<2x8x32xf32>
    %118 = arith.mulf %3, %117 : vector<2x8x32xf32>
    %119 = arith.addf %115, %118 : vector<2x8x32xf32>
    %c2_81 = arith.constant 2 : index
    %c3_82 = arith.constant 3 : index
    %120 = memref.load %arg6[%c2_81, %c3_82] : memref<4x4xf32, #tpu.memory_space<smem>>
    %121 = vector.broadcast %120 : f32 to vector<2x8x32xf32>
    %122 = arith.mulf %5, %121 : vector<2x8x32xf32>
    %123 = arith.addf %119, %122 : vector<2x8x32xf32>
    %c3_83 = arith.constant 3 : index
    %c3_84 = arith.constant 3 : index
    %124 = memref.load %arg6[%c3_83, %c3_84] : memref<4x4xf32, #tpu.memory_space<smem>>
    %125 = vector.broadcast %124 : f32 to vector<2x8x32xf32>
    %126 = arith.mulf %7, %125 : vector<2x8x32xf32>
    %127 = arith.addf %123, %126 : vector<2x8x32xf32>
    %c0_85 = arith.constant 0 : index
    %c3_86 = arith.constant 3 : index
    %128 = memref.load %arg7[%c0_85, %c3_86] : memref<1x4xf32, #tpu.memory_space<smem>>
    %129 = vector.broadcast %128 : f32 to vector<2x8x32xf32>
    %130 = arith.addf %127, %129 : vector<2x8x32xf32>
    %c0_87 = arith.constant 0 : index
    %c0_88 = arith.constant 0 : index
    %c0_89 = arith.constant 0 : index
    %131 = vector.load %arg12[%c0_87, %c0_88, %c0_89] : memref<2x8x32xf32, #tpu.memory_space<vmem>>, vector<2x8x32xf32>
    tpu.vector_store %arg12[%c0_87, %c0_88, %c0_89], %130 {strides = array<i32>} : memref<2x8x32xf32, #tpu.memory_space<vmem>>, vector<2x8x32xf32>,
    %c0_90 = arith.constant 0 : index
    %c0_91 = arith.constant 0 : index
    %c0_92 = arith.constant 0 : index
    %132 = vector.load %arg5[%c0_90, %c0_91, %c0_92] : memref<2x8x32xf32, #tpu.memory_space<vmem>>, vector<2x8x32xf32>
    %133 = arith.subf %130, %132 : vector<2x8x32xf32>
    %134 = math.absf %133 : vector<2x8x32xf32>
    %cst_93 = arith.constant 1.000000e+00 : f32
    %135 = vector.broadcast %cst_93 : f32 to vector<2x8x32xf32>
    %136 = arith.cmpf olt, %134, %135 : vector<2x8x32xf32>
    %cst_94 = arith.constant 5.000000e-01 : f32
    %137 = vector.broadcast %cst_94 : f32 to vector<2x8x32xf32>
    %138 = arith.mulf %137, %133 : vector<2x8x32xf32>
    %139 = arith.mulf %138, %133 : vector<2x8x32xf32>
    %cst_95 = arith.constant 5.000000e-01 : f32
    %140 = vector.broadcast %cst_95 : f32 to vector<2x8x32xf32>
    %141 = arith.subf %134, %140 : vector<2x8x32xf32>
    %142 = arith.select %136, %139, %141 : vector<2x8x32xi1>, vector<2x8x32xf32>
    %cst_96 = arith.constant dense<0.000000e+00> : vector<2x8xf32>
    %143 = vector.multi_reduction <add>, %142, %cst_96 [2] : vector<2x8x32xf32> to vector<2x8xf32>
    %144 = vector.shape_cast %143 : vector<2x8xf32> to vector<2x8x1xf32>
    %cst_97 = arith.constant dense<0.000000e+00> : vector<8x1xf32>
    %145 = vector.multi_reduction <add>, %144, %cst_97 [0] : vector<2x8x1xf32> to vector<8x1xf32>
    %cst_98 = arith.constant dense<0.000000e+00> : vector<1xf32>
    %146 = vector.multi_reduction <add>, %145, %cst_98 [0] : vector<8x1xf32> to vector<1xf32>
    %147 = vector.shape_cast %146 : vector<1xf32> to vector<1x1xf32>
    %148 = tpu.concatenate %42, %77, %112, %147 in 0 : vector<1x1xf32>, vector<1x1xf32>, vector<1x1xf32>, vector<1x1xf32> -> vector<4x1xf32>
    %149 = vector.shape_cast %148 : vector<4x1xf32> to vector<1x4x1xf32>
    %c0_99 = arith.constant 0 : index
    %c0_100 = arith.constant 0 : index
    %c0_101 = arith.constant 0 : index
    %150 = vector.load %arg8[%c0_99, %c0_100, %c0_101] : memref<1x4x1xf32, #tpu.memory_space<vmem>>, vector<1x4x1xf32>
    tpu.vector_store %arg8[%c0_99, %c0_100, %c0_101], %149 {strides = array<i32>} : memref<1x4x1xf32, #tpu.memory_space<vmem>>, vector<1x4x1xf32>,
    return
  }
  func.func @transform_0(%arg0: i32) -> (i32, i32, i32, i32) {
    %c0_i32 = arith.constant 0 : i32
    %c0_i32_0 = arith.constant 0 : i32
    %c0_i32_1 = arith.constant 0 : i32
    %c0_i32_2 = arith.constant 0 : i32
    return %c0_i32, %c0_i32_0, %c0_i32_1, %arg0 : i32, i32, i32, i32
  }
  func.func @transform_1(%arg0: i32) -> (i32, i32, i32) {
    %c0_i32 = arith.constant 0 : i32
    %c0_i32_0 = arith.constant 0 : i32
    %c0_i32_1 = arith.constant 0 : i32
    return %c0_i32, %c0_i32_0, %arg0 : i32, i32, i32
  }
  func.func @transform_2(%arg0: i32) -> (i32, i32, i32) {
    %c0_i32 = arith.constant 0 : i32
    %c0_i32_0 = arith.constant 0 : i32
    %c0_i32_1 = arith.constant 0 : i32
    return %c0_i32, %c0_i32_0, %arg0 : i32, i32, i32
  }
  func.func @transform_3(%arg0: i32) -> (i32, i32, i32) {
    %c0_i32 = arith.constant 0 : i32
    %c0_i32_0 = arith.constant 0 : i32
    %c0_i32_1 = arith.constant 0 : i32
    return %c0_i32, %c0_i32_0, %arg0 : i32, i32, i32
  }
  func.func @transform_4(%arg0: i32) -> (i32, i32, i32) {
    %c0_i32 = arith.constant 0 : i32
    %c0_i32_0 = arith.constant 0 : i32
    %c0_i32_1 = arith.constant 0 : i32
    return %c0_i32, %c0_i32_0, %arg0 : i32, i32, i32
  }
  func.func @transform_5(%arg0: i32) -> (i32, i32) {
    %c0_i32 = arith.constant 0 : i32
    %c0_i32_0 = arith.constant 0 : i32
    %c0_i32_1 = arith.constant 0 : i32
    return %c0_i32, %c0_i32_0 : i32, i32
  }
  func.func @transform_6(%arg0: i32) -> (i32, i32) {
    %c0_i32 = arith.constant 0 : i32
    %c0_i32_0 = arith.constant 0 : i32
    %c0_i32_1 = arith.constant 0 : i32
    return %c0_i32, %c0_i32_0 : i32, i32
  }
  func.func @transform_7(%arg0: i32) -> (i32, i32, i32) {
    %c0_i32 = arith.constant 0 : i32
    %c0_i32_0 = arith.constant 0 : i32
    %c0_i32_1 = arith.constant 0 : i32
    return %arg0, %c0_i32, %c0_i32_0 : i32, i32, i32
  }
  func.func @transform_8(%arg0: i32) -> (i32, i32, i32) {
    %c0_i32 = arith.constant 0 : i32
    %c0_i32_0 = arith.constant 0 : i32
    %c0_i32_1 = arith.constant 0 : i32
    return %c0_i32, %c0_i32_0, %arg0 : i32, i32, i32
  }
  func.func @transform_9(%arg0: i32) -> (i32, i32, i32) {
    %c0_i32 = arith.constant 0 : i32
    %c0_i32_0 = arith.constant 0 : i32
    %c0_i32_1 = arith.constant 0 : i32
    return %c0_i32, %c0_i32_0, %arg0 : i32, i32, i32
  }
  func.func @transform_10(%arg0: i32) -> (i32, i32, i32) {
    %c0_i32 = arith.constant 0 : i32
    %c0_i32_0 = arith.constant 0 : i32
    %c0_i32_1 = arith.constant 0 : i32
    return %c0_i32, %c0_i32_0, %arg0 : i32, i32, i32
  }
  func.func @transform_11(%arg0: i32) -> (i32, i32, i32) {
    %c0_i32 = arith.constant 0 : i32
    %c0_i32_0 = arith.constant 0 : i32
    %c0_i32_1 = arith.constant 0 : i32
    return %c0_i32, %c0_i32_0, %arg0 : i32, i32, i32
  }
}

</mosaic_0001>

<llo_original>
// kernel: tpu_custom_call.1
$region0: #{tpu_custom_call.1}
  #allocation0 [shape = 'u32[]', space=smem, size = 0x4, offset = 0x4, fixed_abs, tag = 'smem constant byte address 0x4 - core index']
  #allocation1 [shape = 'u32[144,128]{1,0:T(1,128)}', space=vmem, size = 0x12000, scoped, tag = 'internal scratch']
  %s0 = inlined_call_operand.hbm [shape: f32[2,4,8,32], index: 0, kind: input, shape index: {}]
  %s1 = inlined_call_operand.hbm [shape: f32[2,8,32], index: 1, kind: input, shape index: {}]
  %s2 = inlined_call_operand.hbm [shape: f32[2,8,32], index: 2, kind: input, shape index: {}]
  %s3 = inlined_call_operand.hbm [shape: f32[2,8,32], index: 3, kind: input, shape index: {}]
  %s4 = inlined_call_operand.hbm [shape: f32[2,8,32], index: 4, kind: input, shape index: {}]
  %s5 = inlined_call_operand.vmem [shape: f32[4,4], index: 5, kind: input, shape index: {}]
  %s6 = inlined_call_operand.vmem [shape: f32[1,4], index: 6, kind: input, shape index: {}]
  %s7 = inlined_call_operand.vmem [shape: f32[1,4,1], index: 7, kind: output, shape index: {0}]
  %s8 = inlined_call_operand.hbm [shape: f32[2,8,32], index: 8, kind: output, shape index: {1}]
  %s9 = inlined_call_operand.hbm [shape: f32[2,8,32], index: 9, kind: output, shape index: {2}]
  %s10 = inlined_call_operand.hbm [shape: f32[2,8,32], index: 10, kind: output, shape index: {3}]
  %s11 = inlined_call_operand.hbm [shape: f32[2,8,32], index: 11, kind: output, shape index: {4}]
  %12 = xla_tuple %s7, %s8, %s9, %s10, %s11
  %s13 = sld [smem:[#allocation0]]
  $region98: #{tpu_custom_call.1} parent=0
    _
  %s15 = ssub.s32 1, %s13
  %s16 = scalar_select 0, %s15, %s13
  $region1: #{tpu_custom_call.1} parent=0
    #allocation2 [shape = 'u8[32768]{0}', space=vmem, size = 0x8000, scoped, tag = 'input window, operand 0, single buffered']
    #allocation3 [shape = 's32[1]{0}', space=sflag, size = 0x4, scoped, tag = 'scoped memory for tpu_custom_call.1']
    #allocation4 [shape = 's32[1]{0}', space=sflag, size = 0x4, scoped, tag = 'scoped memory for tpu_custom_call.1']
    #allocation5 [shape = 's32[1]{0}', space=sflag, size = 0x4, scoped, tag = 'scoped memory for tpu_custom_call.1']
    #allocation6 [shape = 'u8[8192]{0}', space=vmem, size = 0x2000, scoped, tag = 'input window, operand 1, single buffered']
    #allocation7 [shape = 's32[1]{0}', space=sflag, size = 0x4, scoped, tag = 'scoped memory for tpu_custom_call.1']
    #allocation8 [shape = 'u8[8192]{0}', space=vmem, size = 0x2000, scoped, tag = 'input window, operand 2, single buffered']
    #allocation9 [shape = 'u8[8192]{0}', space=vmem, size = 0x2000, scoped, tag = 'input window, operand 3, single buffered']
    #allocation10 [shape = 's32[1]{0}', space=sflag, size = 0x4, scoped, tag = 'scoped memory for tpu_custom_call.1']
    #allocation11 [shape = 'u8[8192]{0}', space=vmem, size = 0x2000, scoped, tag = 'input window, operand 4, single buffered']
    #allocation12 [shape = 'u8[2048]{0}', space=smem, size = 0x800, scoped, tag = 'input window, operand 5, single buffered']
    #allocation13 [shape = 'u8[512]{0}', space=smem, size = 0x200, scoped, tag = 'input window, operand 6, single buffered']
    #allocation14 [shape = 's32[1]{0}', space=sflag, size = 0x4, scoped, tag = 'scoped memory for tpu_custom_call.1']
    #allocation15 [shape = 'u8[8192]{0}', space=vmem, size = 0x2000, scoped, tag = 'output window, operand 1, single buffered']
    #allocation16 [shape = 'u8[8192]{0}', space=vmem, size = 0x2000, scoped, tag = 'output window, operand 2, single buffered']
    #allocation17 [shape = 's32[1]{0}', space=sflag, size = 0x4, scoped, tag = 'scoped memory for tpu_custom_call.1']
    #allocation18 [shape = 'u8[8192]{0}', space=vmem, size = 0x2000, scoped, tag = 'output window, operand 3, single buffered']
    #allocation19 [shape = 'u8[8192]{0}', space=vmem, size = 0x2000, scoped, tag = 'output window, operand 4, single buffered']
    #allocation20 [shape = 's32[1]{0}', space=sflag, size = 0x4, scoped, tag = 'scoped memory for tpu_custom_call.1']
    %17 = vsyncpa [#allocation3], 0
    %18 = vsyncpa [#allocation7], 0
    %19 = vsyncpa [#allocation10], 0
    %20 = vsyncpa [#allocation5], 0
    %21 = vsyncpa [#allocation14], 0
    %22 = vsyncpa [#allocation4], 0
    %23 = vsyncpa [#allocation17], 0
    %24 = vsyncpa [#allocation20], 0
    // Predicated region
    $region2: #{tpu_custom_call.1} parent=1 // pred_check
      _
    $region3: #{tpu_custom_call.1} parent=1 // pred_check_branch
      %26 = sbr.rel (0) target = $region5
    $region4: #{tpu_custom_call.1} parent=1 // pred_region
      %s28 = ssub.s32 1024, 1024
      %29 = vsyncadd [#allocation3], %s28
      %s30 = sshll.u32 [#allocation2], 4
      %s31 = int_to_ptr.vmem [resolvable:$true] %s30
      %36 = dma.hbm_to_vmem [thread:$0]  %s0, 1024, %s31, [#allocation3], 128, 128, 8
    $region5: #{tpu_custom_call.1} parent=1 // pred_fallthru
      _
    // Predicated region
    $region6: #{tpu_custom_call.1} parent=1 // pred_check
      _
    $region7: #{tpu_custom_call.1} parent=1 // pred_check_branch
      %38 = sbr.rel (0) target = $region9
    $region8: #{tpu_custom_call.1} parent=1 // pred_region
      %s40 = ssub.s32 256, 256
      %41 = vsyncadd [#allocation7], %s40
      %s42 = sshll.u32 [#allocation6], 4
      %s43 = int_to_ptr.vmem [resolvable:$true] %s42
      %48 = dma.hbm_to_vmem [thread:$0]  %s1, 256, %s43, [#allocation7], 128, 128, 8
    $region9: #{tpu_custom_call.1} parent=1 // pred_fallthru
      _
    // Predicated region
    $region10: #{tpu_custom_call.1} parent=1 // pred_check
      _
    $region11: #{tpu_custom_call.1} parent=1 // pred_check_branch
      %50 = sbr.rel (0) target = $region13
    $region12: #{tpu_custom_call.1} parent=1 // pred_region
      %s52 = ssub.s32 256, 256
      %53 = vsyncadd [#allocation7], %s52
      %s54 = sshll.u32 [#allocation8], 4
      %s55 = int_to_ptr.vmem [resolvable:$true] %s54
      %60 = dma.hbm_to_vmem [thread:$0]  %s2, 256, %s55, [#allocation7], 128, 128, 8
    $region13: #{tpu_custom_call.1} parent=1 // pred_fallthru
      _
    // Predicated region
    $region14: #{tpu_custom_call.1} parent=1 // pred_check
      _
    $region15: #{tpu_custom_call.1} parent=1 // pred_check_branch
      %62 = sbr.rel (0) target = $region17
    $region16: #{tpu_custom_call.1} parent=1 // pred_region
      %s64 = ssub.s32 256, 256
      %65 = vsyncadd [#allocation10], %s64
      %s66 = sshll.u32 [#allocation9], 4
      %s67 = int_to_ptr.vmem [resolvable:$true] %s66
      %72 = dma.hbm_to_vmem [thread:$0]  %s3, 256, %s67, [#allocation10], 128, 128, 8
    $region17: #{tpu_custom_call.1} parent=1 // pred_fallthru
      _
    // Predicated region
    $region18: #{tpu_custom_call.1} parent=1 // pred_check
      _
    $region19: #{tpu_custom_call.1} parent=1 // pred_check_branch
      %74 = sbr.rel (0) target = $region21
    $region20: #{tpu_custom_call.1} parent=1 // pred_region
      %s76 = ssub.s32 256, 256
      %77 = vsyncadd [#allocation10], %s76
      %s78 = sshll.u32 [#allocation11], 4
      %s79 = int_to_ptr.vmem [resolvable:$true] %s78
      %84 = dma.hbm_to_vmem [thread:$0]  %s4, 256, %s79, [#allocation10], 128, 128, 8
    $region21: #{tpu_custom_call.1} parent=1 // pred_fallthru
      _
    // Predicated region
    $region22: #{tpu_custom_call.1} parent=1 // pred_check
      _
    $region23: #{tpu_custom_call.1} parent=1 // pred_check_branch
      %86 = sbr.rel (0) target = $region25
    $region24: #{tpu_custom_call.1} parent=1 // pred_region
      %s88 = ssub.s32 64, 64
      %89 = vsyncadd [#allocation5], %s88
      %s91 = sshll.u32 %s5, 4
      %s92 = int_to_ptr.vmem [resolvable:$true] %s91
      %94 = dma.vmem_to_smem %s92, 64, [#allocation12], [#allocation5]
    $region25: #{tpu_custom_call.1} parent=1 // pred_fallthru
      _
    // Predicated region
    $region26: #{tpu_custom_call.1} parent=1 // pred_check
      _
    $region27: #{tpu_custom_call.1} parent=1 // pred_check_branch
      %96 = sbr.rel (0) target = $region29
    $region28: #{tpu_custom_call.1} parent=1 // pred_region
      %s98 = ssub.s32 16, 16
      %99 = vsyncadd [#allocation14], %s98
      %s101 = sshll.u32 %s6, 4
      %s102 = int_to_ptr.vmem [resolvable:$true] %s101
      %104 = dma.vmem_to_smem %s102, 16, [#allocation13], [#allocation14]
    $region29: #{tpu_custom_call.1} parent=1 // pred_fallthru
      _
    // Predicated region
    $region30: #{tpu_custom_call.1} parent=1 // pred_check
      _
    $region31: #{tpu_custom_call.1} parent=1 // pred_check_branch
      %106 = sbr.rel (0) target = $region33
    $region32: #{tpu_custom_call.1} parent=1 // pred_region
      %107 = dma.done [#allocation3], 1024
    $region33: #{tpu_custom_call.1} parent=1 // pred_fallthru
      _
    // Predicated region
    $region34: #{tpu_custom_call.1} parent=1 // pred_check
      _
    $region35: #{tpu_custom_call.1} parent=1 // pred_check_branch
      %109 = sbr.rel (0) target = $region37
    $region36: #{tpu_custom_call.1} parent=1 // pred_region
      %110 = dma.done [#allocation7], 256
    $region37: #{tpu_custom_call.1} parent=1 // pred_fallthru
      _
    // Predicated region
    $region38: #{tpu_custom_call.1} parent=1 // pred_check
      _
    $region39: #{tpu_custom_call.1} parent=1 // pred_check_branch
      %112 = sbr.rel (0) target = $region41
    $region40: #{tpu_custom_call.1} parent=1 // pred_region
      %113 = dma.done [#allocation7], 256
    $region41: #{tpu_custom_call.1} parent=1 // pred_fallthru
      _
    // Predicated region
    $region42: #{tpu_custom_call.1} parent=1 // pred_check
      _
    $region43: #{tpu_custom_call.1} parent=1 // pred_check_branch
      %115 = sbr.rel (0) target = $region45
    $region44: #{tpu_custom_call.1} parent=1 // pred_region
      %116 = dma.done [#allocation10], 256
    $region45: #{tpu_custom_call.1} parent=1 // pred_fallthru
      _
    // Predicated region
    $region46: #{tpu_custom_call.1} parent=1 // pred_check
      _
    $region47: #{tpu_custom_call.1} parent=1 // pred_check_branch
      %118 = sbr.rel (0) target = $region49
    $region48: #{tpu_custom_call.1} parent=1 // pred_region
      %119 = dma.done [#allocation10], 256
    $region49: #{tpu_custom_call.1} parent=1 // pred_fallthru
      _
    // Predicated region
    $region50: #{tpu_custom_call.1} parent=1 // pred_check
      _
    $region51: #{tpu_custom_call.1} parent=1 // pred_check_branch
      %121 = sbr.rel (0) target = $region53
    $region52: #{tpu_custom_call.1} parent=1 // pred_region
      %122 = dma.done [#allocation5], 64
    $region53: #{tpu_custom_call.1} parent=1 // pred_fallthru
      _
    // Predicated region
    $region54: #{tpu_custom_call.1} parent=1 // pred_check
      _
    $region55: #{tpu_custom_call.1} parent=1 // pred_check_branch
      %124 = sbr.rel (0) target = $region57
    $region56: #{tpu_custom_call.1} parent=1 // pred_region
      %125 = dma.done [#allocation14], 16
    $region57: #{tpu_custom_call.1} parent=1 // pred_fallthru
      _
    %126 = sfence
    %v127 = vld [vmem:[#allocation2] sm:$0xff]
    %v128 = vld [vmem:[#allocation2 + $0x20] sm:$0xff]
    %s129 = scalar_lea.vmem [#allocation2], 8
    %v130 = vld [vmem:[%s129] sm:$0xff]
    %v131 = vld [vmem:[%s129 + $0x20] sm:$0xff]
    %s132 = scalar_lea.vmem [#allocation2], 16
    %v133 = vld [vmem:[%s132] sm:$0xff]
    %v134 = vld [vmem:[%s132 + $0x20] sm:$0xff]
    %s135 = scalar_lea.vmem [#allocation2], 24
    %v136 = vld [vmem:[%s135] sm:$0xff]
    %v137 = vld [vmem:[%s135 + $0x20] sm:$0xff]
    %s138 = sld [smem:[#allocation12]]
    %v139 = vstv %s138
    %v140 = vmul.f32 %v127, %v139
    %v141 = vmul.f32 %v128, %v139
    %s142 = sld [smem:[#allocation12 + $0x80]]
    %v143 = vstv %s142
    %v144 = vmul.f32 %v130, %v143
    %v145 = vmul.f32 %v131, %v143
    %v146 = vadd.f32 %v140, %v144
    %v147 = vadd.f32 %v141, %v145
    %s148 = sld [smem:[#allocation12 + $0x100]]
    %v149 = vstv %s148
    %v150 = vmul.f32 %v133, %v149
    %v151 = vmul.f32 %v134, %v149
    %v152 = vadd.f32 %v146, %v150
    %v153 = vadd.f32 %v147, %v151
    %s154 = sld [smem:[#allocation12 + $0x180]]
    %v155 = vstv %s154
    %v156 = vmul.f32 %v136, %v155
    %v157 = vmul.f32 %v137, %v155
    %v158 = vadd.f32 %v152, %v156
    %v159 = vadd.f32 %v153, %v157
    %s160 = sld [smem:[#allocation13]]
    %v161 = vstv %s160
    %v162 = vadd.f32 %v158, %v161
    %v163 = vadd.f32 %v159, %v161
    %vm164 = vcmask 261120
    %165 = vst.msk [vmem:[#allocation15] sm:$0xff] %vm164, %v162
    %166 = vst.msk [vmem:[#allocation15 + $0x8] sm:$0xff] %vm164, %v163
    %v167 = vld [vmem:[#allocation6] sm:$0xff]
    %v168 = vld [vmem:[#allocation6 + $0x8] sm:$0xff]
    %v169 = vsub.f32 %v162, %v167
    %v170 = vsub.f32 %v163, %v168
    %v171 = vand.u32 2147483647, %v169
    %v172 = vand.u32 2147483647, %v170
    %vm173 = vcmp.lt.f32.partialorder %v171, 1.0
    %vm174 = vcmp.lt.f32.partialorder %v172, 1.0
    %v175 = vmul.f32 %v169, 0.5
    %v176 = vmul.f32 %v170, 0.5
    %v177 = vmul.f32 %v175, %v169
    %v178 = vmul.f32 %v176, %v170
    %v179 = vsub.f32 %v171, 0.5
    %v180 = vsub.f32 %v172, 0.5
    %v181 = vsel %vm173, %v177, %v179
    %v182 = vsel %vm174, %v178, %v180
    %v183 = vsel %vm164, %v181, 0.0
    %184 = vadd.xlane.f32.xlu0 %v183
    %v185 = vpop.xlane.xlu0 %184
    %v186 = vsel %vm164, %v182, 0.0
    %187 = vadd.xlane.f32.xlu0 %v186
    %v188 = vpop.xlane.xlu0 %187
    %v189 = vadd.f32 %v185, %v188
    %v190 = vrot.slane %v189, 4
    %v191 = vadd.f32 %v189, %v190
    %v192 = vrot.slane %v191, 2
    %v193 = vadd.f32 %v191, %v192
    %v194 = vrot.slane %v193, 1
    %v195 = vadd.f32 %v193, %v194
    %s196 = sld [smem:[#allocation12 + $0x1]]
    %v197 = vstv %s196
    %v198 = vmul.f32 %v127, %v197
    %v199 = vmul.f32 %v128, %v197
    %s200 = sld [smem:[#allocation12 + $0x81]]
    %v201 = vstv %s200
    %v202 = vmul.f32 %v130, %v201
    %v203 = vmul.f32 %v131, %v201
    %v204 = vadd.f32 %v198, %v202
    %v205 = vadd.f32 %v199, %v203
    %s206 = sld [smem:[#allocation12 + $0x101]]
    %v207 = vstv %s206
    %v208 = vmul.f32 %v133, %v207
    %v209 = vmul.f32 %v134, %v207
    %v210 = vadd.f32 %v204, %v208
    %v211 = vadd.f32 %v205, %v209
    %s212 = sld [smem:[#allocation12 + $0x181]]
    %v213 = vstv %s212
    %v214 = vmul.f32 %v136, %v213
    %v215 = vmul.f32 %v137, %v213
    %v216 = vadd.f32 %v210, %v214
    %v217 = vadd.f32 %v211, %v215
    %s218 = sld [smem:[#allocation13 + $0x1]]
    %v219 = vstv %s218
    %v220 = vadd.f32 %v216, %v219
    %v221 = vadd.f32 %v217, %v219
    %222 = vst.msk [vmem:[#allocation16] sm:$0xff] %vm164, %v220
    %223 = vst.msk [vmem:[#allocation16 + $0x8] sm:$0xff] %vm164, %v221
    %v224 = vld [vmem:[#allocation8] sm:$0xff]
    %v225 = vld [vmem:[#allocation8 + $0x8] sm:$0xff]
    %v226 = vsub.f32 %v220, %v224
    %v227 = vsub.f32 %v221, %v225
    %v228 = vand.u32 2147483647, %v226
    %v229 = vand.u32 2147483647, %v227
    %vm230 = vcmp.lt.f32.partialorder %v228, 1.0
    %vm231 = vcmp.lt.f32.partialorder %v229, 1.0
    %v232 = vmul.f32 %v226, 0.5
    %v233 = vmul.f32 %v227, 0.5
    %v234 = vmul.f32 %v232, %v226
    %v235 = vmul.f32 %v233, %v227
    %v236 = vsub.f32 %v228, 0.5
    %v237 = vsub.f32 %v229, 0.5
    %v238 = vsel %vm230, %v234, %v236
    %v239 = vsel %vm231, %v235, %v237
    %v240 = vsel %vm164, %v238, 0.0
    %241 = vadd.xlane.f32.xlu0 %v240
    %v242 = vpop.xlane.xlu0 %241
    %v243 = vsel %vm164, %v239, 0.0
    %244 = vadd.xlane.f32.xlu0 %v243
    %v245 = vpop.xlane.xlu0 %244
    %v246 = vadd.f32 %v242, %v245
    %v247 = vrot.slane %v246, 4
    %v248 = vadd.f32 %v246, %v247
    %v249 = vrot.slane %v248, 2
    %v250 = vadd.f32 %v248, %v249
    %v251 = vrot.slane %v250, 1
    %v252 = vadd.f32 %v250, %v251
    %s253 = sld [smem:[#allocation12 + $0x2]]
    %v254 = vstv %s253
    %v255 = vmul.f32 %v127, %v254
    %v256 = vmul.f32 %v128, %v254
    %s257 = sld [smem:[#allocation12 + $0x82]]
    %v258 = vstv %s257
    %v259 = vmul.f32 %v130, %v258
    %v260 = vmul.f32 %v131, %v258
    %v261 = vadd.f32 %v255, %v259
    %v262 = vadd.f32 %v256, %v260
    %s263 = sld [smem:[#allocation12 + $0x102]]
    %v264 = vstv %s263
    %v265 = vmul.f32 %v133, %v264
    %v266 = vmul.f32 %v134, %v264
    %v267 = vadd.f32 %v261, %v265
    %v268 = vadd.f32 %v262, %v266
    %s269 = sld [smem:[#allocation12 + $0x182]]
    %v270 = vstv %s269
    %v271 = vmul.f32 %v136, %v270
    %v272 = vmul.f32 %v137, %v270
    %v273 = vadd.f32 %v267, %v271
    %v274 = vadd.f32 %v268, %v272
    %s275 = sld [smem:[#allocation13 + $0x2]]
    %v276 = vstv %s275
    %v277 = vadd.f32 %v273, %v276
    %v278 = vadd.f32 %v274, %v276
    %279 = vst.msk [vmem:[#allocation18] sm:$0xff] %vm164, %v277
    %280 = vst.msk [vmem:[#allocation18 + $0x8] sm:$0xff] %vm164, %v278
    %v281 = vld [vmem:[#allocation9] sm:$0xff]
    %v282 = vld [vmem:[#allocation9 + $0x8] sm:$0xff]
    %v283 = vsub.f32 %v277, %v281
    %v284 = vsub.f32 %v278, %v282
    %v285 = vand.u32 2147483647, %v283
    %v286 = vand.u32 2147483647, %v284
    %vm287 = vcmp.lt.f32.partialorder %v285, 1.0
    %vm288 = vcmp.lt.f32.partialorder %v286, 1.0
    %v289 = vmul.f32 %v283, 0.5
    %v290 = vmul.f32 %v284, 0.5
    %v291 = vmul.f32 %v289, %v283
    %v292 = vmul.f32 %v290, %v284
    %v293 = vsub.f32 %v285, 0.5
    %v294 = vsub.f32 %v286, 0.5
    %v295 = vsel %vm287, %v291, %v293
    %v296 = vsel %vm288, %v292, %v294
    %v297 = vsel %vm164, %v295, 0.0
    %298 = vadd.xlane.f32.xlu0 %v297
    %v299 = vpop.xlane.xlu0 %298
    %v300 = vsel %vm164, %v296, 0.0
    %301 = vadd.xlane.f32.xlu0 %v300
    %v302 = vpop.xlane.xlu0 %301
    %v303 = vadd.f32 %v299, %v302
    %v304 = vrot.slane %v303, 4
    %v305 = vadd.f32 %v303, %v304
    %v306 = vrot.slane %v305, 2
    %v307 = vadd.f32 %v305, %v306
    %v308 = vrot.slane %v307, 1
    %v309 = vadd.f32 %v307, %v308
    %s310 = sld [smem:[#allocation12 + $0x3]]
    %v311 = vstv %s310
    %v312 = vmul.f32 %v127, %v311
    %v313 = vmul.f32 %v128, %v311
    %s314 = sld [smem:[#allocation12 + $0x83]]
    %v315 = vstv %s314
    %v316 = vmul.f32 %v130, %v315
    %v317 = vmul.f32 %v131, %v315
    %v318 = vadd.f32 %v312, %v316
    %v319 = vadd.f32 %v313, %v317
    %s320 = sld [smem:[#allocation12 + $0x103]]
    %v321 = vstv %s320
    %v322 = vmul.f32 %v133, %v321
    %v323 = vmul.f32 %v134, %v321
    %v324 = vadd.f32 %v318, %v322
    %v325 = vadd.f32 %v319, %v323
    %s326 = sld [smem:[#allocation12 + $0x183]]
    %v327 = vstv %s326
    %v328 = vmul.f32 %v136, %v327
    %v329 = vmul.f32 %v137, %v327
    %v330 = vadd.f32 %v324, %v328
    %v331 = vadd.f32 %v325, %v329
    %s332 = sld [smem:[#allocation13 + $0x3]]
    %v333 = vstv %s332
    %v334 = vadd.f32 %v330, %v333
    %v335 = vadd.f32 %v331, %v333
    %336 = vst.msk [vmem:[#allocation19] sm:$0xff] %vm164, %v334
    %337 = vst.msk [vmem:[#allocation19 + $0x8] sm:$0xff] %vm164, %v335
    %v338 = vld [vmem:[#allocation11] sm:$0xff]
    %v339 = vld [vmem:[#allocation11 + $0x8] sm:$0xff]
    %v340 = vsub.f32 %v334, %v338
    %v341 = vsub.f32 %v335, %v339
    %v342 = vand.u32 2147483647, %v340
    %v343 = vand.u32 2147483647, %v341
    %vm344 = vcmp.lt.f32.partialorder %v342, 1.0
    %vm345 = vcmp.lt.f32.partialorder %v343, 1.0
    %v346 = vmul.f32 %v340, 0.5
    %v347 = vmul.f32 %v341, 0.5
    %v348 = vmul.f32 %v346, %v340
    %v349 = vmul.f32 %v347, %v341
    %v350 = vsub.f32 %v342, 0.5
    %v351 = vsub.f32 %v343, 0.5
    %v352 = vsel %vm344, %v348, %v350
    %v353 = vsel %vm345, %v349, %v351
    %v354 = vsel %vm164, %v352, 0.0
    %355 = vadd.xlane.f32.xlu0 %v354
    %v356 = vpop.xlane.xlu0 %355
    %v357 = vsel %vm164, %v353, 0.0
    %358 = vadd.xlane.f32.xlu0 %v357
    %v359 = vpop.xlane.xlu0 %358
    %v360 = vadd.f32 %v356, %v359
    %v361 = vrot.slane %v360, 4
    %v362 = vadd.f32 %v360, %v361
    %v363 = vrot.slane %v362, 2
    %v364 = vadd.f32 %v362, %v363
    %v365 = vrot.slane %v364, 1
    %v366 = vadd.f32 %v364, %v365
    %vm367 = vcmask 1040384
    %v368 = vsel %vm367, %v195, %v252
    %vm369 = vcmask 1041408
    %v370 = vsel %vm369, %v368, %v309
    %vm371 = vcmask 1042432
    %v372 = vsel %vm371, %v370, %v366
    %vm373 = vcmask 3072
    %374 = vst.msk [vmem:[%s7] sm:$0xf] %vm373, %v372
    // Predicated region
    $region58: #{tpu_custom_call.1} parent=1 // pred_check
      _
    $region59: #{tpu_custom_call.1} parent=1 // pred_check_branch
      %376 = sbr.rel (0) target = $region61
    $region60: #{tpu_custom_call.1} parent=1 // pred_region
      _
    $region61: #{tpu_custom_call.1} parent=1 // pred_fallthru
      _
    // Predicated region
    $region62: #{tpu_custom_call.1} parent=1 // pred_check
      _
    $region63: #{tpu_custom_call.1} parent=1 // pred_check_branch
      %378 = sbr.rel (0) target = $region65
    $region64: #{tpu_custom_call.1} parent=1 // pred_region
      %s380 = ssub.s32 256, 256
      %381 = vsyncadd [#allocation4], %s380
      %s382 = sshll.u32 [#allocation15], 4
      %s383 = int_to_ptr.vmem [resolvable:$true] %s382
      %388 = dma.vmem_to_hbm [thread:$0]  %s383, 256, %s8, [#allocation4], 128, 128, 8
    $region65: #{tpu_custom_call.1} parent=1 // pred_fallthru
      _
    // Predicated region
    $region66: #{tpu_custom_call.1} parent=1 // pred_check
      _
    $region67: #{tpu_custom_call.1} parent=1 // pred_check_branch
      %390 = sbr.rel (0) target = $region69
    $region68: #{tpu_custom_call.1} parent=1 // pred_region
      %s392 = ssub.s32 256, 256
      %393 = vsyncadd [#allocation17], %s392
      %s394 = sshll.u32 [#allocation16], 4
      %s395 = int_to_ptr.vmem [resolvable:$true] %s394
      %400 = dma.vmem_to_hbm [thread:$0]  %s395, 256, %s9, [#allocation17], 128, 128, 8
    $region69: #{tpu_custom_call.1} parent=1 // pred_fallthru
      _
    // Predicated region
    $region70: #{tpu_custom_call.1} parent=1 // pred_check
      _
    $region71: #{tpu_custom_call.1} parent=1 // pred_check_branch
      %402 = sbr.rel (0) target = $region73
    $region72: #{tpu_custom_call.1} parent=1 // pred_region
      %s404 = ssub.s32 256, 256
      %405 = vsyncadd [#allocation17], %s404
      %s406 = sshll.u32 [#allocation18], 4
      %s407 = int_to_ptr.vmem [resolvable:$true] %s406
      %412 = dma.vmem_to_hbm [thread:$0]  %s407, 256, %s10, [#allocation17], 128, 128, 8
    $region73: #{tpu_custom_call.1} parent=1 // pred_fallthru
      _
    // Predicated region
    $region74: #{tpu_custom_call.1} parent=1 // pred_check
      _
    $region75: #{tpu_custom_call.1} parent=1 // pred_check_branch
      %414 = sbr.rel (0) target = $region77
    $region76: #{tpu_custom_call.1} parent=1 // pred_region
      %s416 = ssub.s32 256, 256
      %417 = vsyncadd [#allocation20], %s416
      %s418 = sshll.u32 [#allocation19], 4
      %s419 = int_to_ptr.vmem [resolvable:$true] %s418
      %424 = dma.vmem_to_hbm [thread:$0]  %s419, 256, %s11, [#allocation20], 128, 128, 8
    $region77: #{tpu_custom_call.1} parent=1 // pred_fallthru
      _
    // Predicated region
    $region78: #{tpu_custom_call.1} parent=1 // pred_check
      _
    $region79: #{tpu_custom_call.1} parent=1 // pred_check_branch
      %426 = sbr.rel (0) target = $region81
    $region80: #{tpu_custom_call.1} parent=1 // pred_region
      _
    $region81: #{tpu_custom_call.1} parent=1 // pred_fallthru
      _
    // Predicated region
    $region82: #{tpu_custom_call.1} parent=1 // pred_check
      _
    $region83: #{tpu_custom_call.1} parent=1 // pred_check_branch
      %428 = sbr.rel (0) target = $region85
    $region84: #{tpu_custom_call.1} parent=1 // pred_region
      %429 = dma.done [#allocation4], 256
    $region85: #{tpu_custom_call.1} parent=1 // pred_fallthru
      _
    // Predicated region
    $region86: #{tpu_custom_call.1} parent=1 // pred_check
      _
    $region87: #{tpu_custom_call.1} parent=1 // pred_check_branch
      %431 = sbr.rel (0) target = $region89
    $region88: #{tpu_custom_call.1} parent=1 // pred_region
      %432 = dma.done [#allocation17], 256
    $region89: #{tpu_custom_call.1} parent=1 // pred_fallthru
      _
    // Predicated region
    $region90: #{tpu_custom_call.1} parent=1 // pred_check
      _
    $region91: #{tpu_custom_call.1} parent=1 // pred_check_branch
      %434 = sbr.rel (0) target = $region93
    $region92: #{tpu_custom_call.1} parent=1 // pred_region
      %435 = dma.done [#allocation17], 256
    $region93: #{tpu_custom_call.1} parent=1 // pred_fallthru
      _
    // Predicated region
    $region94: #{tpu_custom_call.1} parent=1 // pred_check
      _
    $region95: #{tpu_custom_call.1} parent=1 // pred_check_branch
      %437 = sbr.rel (0) target = $region97
    $region96: #{tpu_custom_call.1} parent=1 // pred_region
      %438 = dma.done [#allocation20], 256
    $region97: #{tpu_custom_call.1} parent=1 // pred_fallthru
      _
    %439 = vsyncpa [#allocation3], 1
    %440 = vsyncpa [#allocation7], 1
    %441 = vsyncpa [#allocation10], 1
    %442 = vsyncpa [#allocation4], 1
    %443 = vsyncpa [#allocation17], 1
    %444 = vsyncpa [#allocation20], 1
    %445 = vsyncpa [#allocation5], 1
    %446 = vsyncpa [#allocation14], 1

</llo_original>
